<compile_context>
chip_gen: v7x
topology: tpu7x:2x2x1
jax: 0.10.0
libtpu: 0.0.40
codegen_flags: <defaults>
</compile_context>

<pallas_src>
import jax
import jax.numpy as jnp
from jax.experimental import pallas as pl
from jax.experimental.pallas import tpu as pltpu


def policy_kernel(x_ref, slab_ref, o_ref):
    # x: scalar from SMEM
    x = x_ref[0, 0]

    # --- unpack the single bf16 slab (all section starts are multiples of 16) ---
    w2 = slab_ref[0:128, :]                                  # (128,128) bf16
    vec = slab_ref[128:144, :].astype(jnp.float32)           # (16,128) f32
    wh = slab_ref[144:160, :].astype(jnp.float32)[0:8, :]    # (8,128)  f32
    bh = slab_ref[160:176, :].astype(jnp.float32)[0:8, :]    # (8,128)  f32

    w1 = vec[0:1, :]          # (1,128)
    b1 = vec[1:2, :]          # (1,128)
    b2 = vec[2:3, :]          # (1,128)

    # layer 1: Linear(1,128) + ReLU  (in_features=1 -> exact as elementwise x*w+b)
    h1 = jnp.maximum(x * w1 + b1, 0.0)                                   # (1,128) f32

    # layer 2: Linear(128,128) + ReLU — single bf16 MXU pass, f32 accumulate
    h2 = jnp.maximum(
        jnp.dot(h1.astype(jnp.bfloat16), w2,
                preferred_element_type=jnp.float32) + b2,
        0.0,
    )                                                                    # (1,128) f32

    # heads: VPU multiply + XLU lane reduction instead of a 2nd MXU pass
    heads = jnp.sum(h2 * wh, axis=-1, keepdims=True)                     # (8,1)

    # clip does all clamps: mean rows -> clamp(.,0,1); zeroed log_std rows -> 0
    o_ref[...] = jnp.clip(heads + bh, 0.0, 1.0)                          # (8,128)


@jax.jit
def policy_forward(x, slab):
    out = pl.pallas_call(
        policy_kernel,
        out_shape=jax.ShapeDtypeStruct((8, 128), jnp.float32),
        in_specs=[
            pl.BlockSpec(memory_space=pltpu.MemorySpace.SMEM),   # x     (1,1)   f32
            pl.BlockSpec(memory_space=pltpu.MemorySpace.VMEM),   # slab  (176,128) bf16
        ],
        out_specs=pl.BlockSpec(memory_space=pltpu.MemorySpace.VMEM),
        cost_estimate=pl.CostEstimate(
            flops=2 * 128 * 128 + 2 * 8 * 128 + 4 * 128,
            transcendentals=0,
            bytes_accessed=176 * 128 * 2 + 8 * 128 * 4 + 4,
        ),
    )(x, slab)

    # single slice, single output buffer: rows 0..2 = means, rows 3..5 = log_stds
    return out[0:6, 0]                                                   # (6,)


def init_params(key):
    """Deterministic init mirroring nn.Linear defaults: U(-1/sqrt(fan_in), +).

    Returns the packed bf16 parameter slab (176, 128). The log_std head rows
    are intentionally left zero (torch.clamp(x, 0, 0) == 0 identically).
    """
    def uinit(k, shape, fan_in):
        bound = 1.0 / float(fan_in) ** 0.5
        return jax.random.uniform(k, shape, jnp.float32, -bound, bound)

    ks = jax.random.split(key, 10)
    w1 = uinit(ks[0], (128,), 1)          # l1.weight (128,1) stored as a row
    b1 = uinit(ks[1], (128,), 1)
    w2 = uinit(ks[2], (128, 128), 128)    # stored transposed vs torch: y = x @ w2
    b2 = uinit(ks[3], (128,), 128)
    head_w = [uinit(ks[4 + i], (128,), 128) for i in range(3)]   # red, green, blue
    head_b = [uinit(ks[7 + i], (), 128) for i in range(3)]

    slab = jnp.zeros((176, 128), jnp.float32)
    slab = slab.at[0:128].set(w2)
    slab = slab.at[128].set(w1).at[129].set(b1).at[130].set(b2)
    for r in range(3):
        slab = slab.at[144 + r].set(head_w[r])
        slab = slab.at[160 + r].set(jnp.full((128,), head_b[r], jnp.float32))
    return slab.astype(jnp.bfloat16)


def reference_means(x_scalar, slab):
    """Pure-JAX reference of the forward pass (mean heads), using the same
    bf16-quantized parameters and bf16-operand / f32-accumulate matmul."""
    s = slab.astype(jnp.float32)
    w1, b1, b2 = s[128], s[129], s[130]
    wh = s[144:147]                       # (3,128)
    bh = s[160:163, 0]                    # (3,)
    h1 = jnp.maximum(x_scalar * w1 + b1, 0.0)
    h2 = jnp.dot(h1.astype(jnp.bfloat16)[None, :], slab[0:128],
                 preferred_element_type=jnp.float32)[0]
    h2 = jnp.maximum(h2 + b2, 0.0)
    return jnp.clip(wh @ h2 + bh, 0.0, 1.0)


if __name__ == "__main__":
    key = jax.random.PRNGKey(0)
    k_params, k_input = jax.random.split(key)
    slab = init_params(k_params)

    # the module draws torch.randn(1) internally; drawn here deterministically
    x = jax.random.normal(k_input, (1, 1), dtype=jnp.float32)

    out6 = policy_forward(x, slab)
    out6 = jax.block_until_ready(out6)

    # unpack into the module's 6-tuple output order
    red_mean, green_mean, blue_mean = out6[0:1], out6[1:2], out6[2:3]
    red_log_std, green_log_std, blue_log_std = out6[3:4], out6[4:5], out6[5:6]
    outs = (red_mean, red_log_std, green_mean, green_log_std,
            blue_mean, blue_log_std)

    # shape / range checks (forward semantics)
    for t in outs:
        assert t.shape == (1,)
    assert float(red_log_std[0]) == 0.0
    assert float(green_log_std[0]) == 0.0
    assert float(blue_log_std[0]) == 0.0
    for m in (red_mean, green_mean, blue_mean):
        assert 0.0 <= float(m[0]) <= 1.0

    # numeric check against a pure-JAX reference
    means_ref = reference_means(x[0, 0], slab)
    means_ker = out6[0:3]
    assert jnp.allclose(means_ker, means_ref, atol=2e-3, rtol=2e-3), (
        means_ker, means_ref)

    print("KERNEL_OK")
</pallas_src>

<mosaic_0001>
module attributes {stable_mosaic.version = 11 : i64} {
  func.func @policy_kernel(%arg0: memref<1x1xf32, #tpu.memory_space<smem>>, %arg1: memref<176x128xbf16, #tpu.memory_space<vmem>>, %arg2: memref<8x128xf32, #tpu.memory_space<vmem>>) attributes {dimension_semantics = [], scalar_prefetch = 0 : i64, scratch_operands = 0 : i64, tpu.core_type = #tpu.core_type<tc>} {
    %c0 = arith.constant 0 : index
    %c0_0 = arith.constant 0 : index
    %0 = memref.load %arg0[%c0, %c0_0] : memref<1x1xf32, #tpu.memory_space<smem>>
    %c0_1 = arith.constant 0 : index
    %c0_2 = arith.constant 0 : index
    %1 = vector.load %arg1[%c0_1, %c0_2] : memref<176x128xbf16, #tpu.memory_space<vmem>>, vector<128x128xbf16>
    %c128 = arith.constant 128 : index
    %c0_3 = arith.constant 0 : index
    %2 = vector.load %arg1[%c128, %c0_3] : memref<176x128xbf16, #tpu.memory_space<vmem>>, vector<16x128xbf16>
    %3 = arith.extf %2 : vector<16x128xbf16> to vector<16x128xf32>
    %c144 = arith.constant 144 : index
    %c0_4 = arith.constant 0 : index
    %4 = vector.load %arg1[%c144, %c0_4] : memref<176x128xbf16, #tpu.memory_space<vmem>>, vector<16x128xbf16>
    %5 = arith.extf %4 : vector<16x128xbf16> to vector<16x128xf32>
    %6 = vector.extract_strided_slice %5 {offsets = [0, 0], sizes = [8, 128], strides = [1, 1]} : vector<16x128xf32> to vector<8x128xf32>
    %c160 = arith.constant 160 : index
    %c0_5 = arith.constant 0 : index
    %7 = vector.load %arg1[%c160, %c0_5] : memref<176x128xbf16, #tpu.memory_space<vmem>>, vector<16x128xbf16>
    %8 = arith.extf %7 : vector<16x128xbf16> to vector<16x128xf32>
    %9 = vector.extract_strided_slice %8 {offsets = [0, 0], sizes = [8, 128], strides = [1, 1]} : vector<16x128xf32> to vector<8x128xf32>
    %10 = vector.extract_strided_slice %3 {offsets = [0, 0], sizes = [1, 128], strides = [1, 1]} : vector<16x128xf32> to vector<1x128xf32>
    %11 = vector.extract_strided_slice %3 {offsets = [1, 0], sizes = [1, 128], strides = [1, 1]} : vector<16x128xf32> to vector<1x128xf32>
    %12 = vector.extract_strided_slice %3 {offsets = [2, 0], sizes = [1, 128], strides = [1, 1]} : vector<16x128xf32> to vector<1x128xf32>
    %13 = vector.broadcast %0 : f32 to vector<1x128xf32>
    %14 = arith.mulf %13, %10 : vector<1x128xf32>
    %15 = arith.addf %14, %11 : vector<1x128xf32>
    %cst = arith.constant 0.000000e+00 : f32
    %16 = vector.broadcast %cst : f32 to vector<1x128xf32>
    %17 = arith.maximumf %15, %16 : vector<1x128xf32>
    %18 = arith.truncf %17 : vector<1x128xf32> to vector<1x128xbf16>
    %cst_6 = arith.constant dense<0.000000e+00> : vector<1x128xf32>
    %19 = tpu.matmul %18, %1, %cst_6 {dimension_numbers = #tpu.dot_dimension_numbers<[1], [0], [0], [1], [0, 0, 1, 1], [], []>} : vector<1x128xbf16>, vector<128x128xbf16>, vector<1x128xf32> -> vector<1x128xf32>
    %20 = arith.addf %19, %12 : vector<1x128xf32>
    %cst_7 = arith.constant 0.000000e+00 : f32
    %21 = vector.broadcast %cst_7 : f32 to vector<1x128xf32>
    %22 = arith.maximumf %20, %21 : vector<1x128xf32>
    %23 = vector.broadcast %22 : vector<1x128xf32> to vector<8x128xf32>
    %24 = arith.mulf %23, %6 : vector<8x128xf32>
    %cst_8 = arith.constant dense<0.000000e+00> : vector<8xf32>
    %25 = vector.multi_reduction <add>, %24, %cst_8 [1] : vector<8x128xf32> to vector<8xf32>
    %26 = vector.shape_cast %25 : vector<8xf32> to vector<8x1xf32>
    %27 = vector.broadcast %26 : vector<8x1xf32> to vector<8x128xf32>
    %28 = arith.addf %27, %9 : vector<8x128xf32>
    %cst_9 = arith.constant 0.000000e+00 : f32
    %cst_10 = arith.constant 1.000000e+00 : f32
    %29 = vector.broadcast %cst_9 : f32 to vector<8x128xf32>
    %30 = arith.maximumf %29, %28 : vector<8x128xf32>
    %31 = vector.broadcast %cst_10 : f32 to vector<8x128xf32>
    %32 = arith.minimumf %31, %30 : vector<8x128xf32>
    %c0_11 = arith.constant 0 : index
    %c0_12 = arith.constant 0 : index
    %33 = vector.load %arg2[%c0_11, %c0_12] : memref<8x128xf32, #tpu.memory_space<vmem>>, vector<8x128xf32>
    tpu.vector_store %arg2[%c0_11, %c0_12], %32 {strides = array<i32>} : memref<8x128xf32, #tpu.memory_space<vmem>>, vector<8x128xf32>,
    return
  }
}

</mosaic_0001>

<llo_original>
// kernel: policy_forward.1
$region0: #{policy_forward.1}
  #allocation0 [shape = 'u32[]', space=smem, size = 0x4, offset = 0x4, fixed_abs, tag = 'smem constant byte address 0x4 - core index']
  #allocation1 [shape = 'u32[144,128]{1,0:T(1,128)}', space=vmem, size = 0x12000, scoped, tag = 'internal scratch']
  #allocation2 [shape = 'f32[1,1]{1,0:T(1,128)S(6)}', space=smem, size = 0x200, scoped, tag = 'scoped memory for policy_forward.1']
  %s0 = inlined_call_operand.<no memory space> [shape: f32[1,1], index: 0, kind: input, shape index: {}]
  %s1 = inlined_call_operand.hbm [shape: bf16[176,128], index: 1, kind: input, shape index: {}]
  %s2 = inlined_call_operand.vmem [shape: f32[8,128], index: 2, kind: output, shape index: {}]
  %s3 = sld [smem:[#allocation0]]
  $region22: #{policy_forward.1} parent=0
    _
  %s5 = ssub.s32 1, %s3
  %s6 = scalar_select 0, %s5, %s3
  %7 = sst [smem:[#allocation2]] %s0
  $region1: #{policy_forward.1} parent=0
    #allocation3 [shape = 'u8[45056]{0}', space=vmem, size = 0xb000, scoped, tag = 'input window, operand 1, single buffered']
    #allocation4 [shape = 's32[1]{0}', space=sflag, size = 0x4, scoped, tag = 'scoped memory for policy_forward.1']
    %8 = vsyncpa [#allocation4], 0
    // Predicated region
    $region2: #{policy_forward.1} parent=1 // pred_check
      _
    $region3: #{policy_forward.1} parent=1 // pred_check_branch
      %10 = sbr.rel (0) target = $region5
    $region4: #{policy_forward.1} parent=1 // pred_region
      _
    $region5: #{policy_forward.1} parent=1 // pred_fallthru
      _
    // Predicated region
    $region6: #{policy_forward.1} parent=1 // pred_check
      _
    $region7: #{policy_forward.1} parent=1 // pred_check_branch
      %12 = sbr.rel (0) target = $region9
    $region8: #{policy_forward.1} parent=1 // pred_region
      %s14 = ssub.s32 1408, 1408
      %15 = vsyncadd [#allocation4], %s14
      %s16 = sshll.u32 [#allocation3], 4
      %s17 = int_to_ptr.vmem [resolvable:$true] %s16
      %22 = dma.hbm_to_vmem [thread:$0]  %s1, 1408, %s17, [#allocation4], 64, 64, 4
    $region9: #{policy_forward.1} parent=1 // pred_fallthru
      _
    // Predicated region
    $region10: #{policy_forward.1} parent=1 // pred_check
      _
    $region11: #{policy_forward.1} parent=1 // pred_check_branch
      %24 = sbr.rel (0) target = $region13
    $region12: #{policy_forward.1} parent=1 // pred_region
      %25 = dma.done [#allocation4], 1408
    $region13: #{policy_forward.1} parent=1 // pred_fallthru
      _
    %s27 = sld [smem:[#allocation2]]
    %v28 = vld [vmem:[#allocation3] sm:$0xf]
    %v29 = vld [vmem:[#allocation3 + $0x4] sm:$0xf]
    %v30 = vld [vmem:[#allocation3 + $0x8] sm:$0xf]
    %v31 = vld [vmem:[#allocation3 + $0xc] sm:$0xf]
    %v32 = vld [vmem:[#allocation3 + $0x10] sm:$0xf]
    %v33 = vld [vmem:[#allocation3 + $0x14] sm:$0xf]
    %v34 = vld [vmem:[#allocation3 + $0x18] sm:$0xf]
    %v35 = vld [vmem:[#allocation3 + $0x1c] sm:$0xf]
    %v36 = vld [vmem:[#allocation3 + $0x20] sm:$0xf]
    %v37 = vld [vmem:[#allocation3 + $0x24] sm:$0xf]
    %v38 = vld [vmem:[#allocation3 + $0x28] sm:$0xf]
    %v39 = vld [vmem:[#allocation3 + $0x2c] sm:$0xf]
    %v40 = vld [vmem:[#allocation3 + $0x30] sm:$0xf]
    %v41 = vld [vmem:[#allocation3 + $0x34] sm:$0xf]
    %v42 = vld [vmem:[#allocation3 + $0x38] sm:$0xf]
    %v43 = vld [vmem:[#allocation3 + $0x3c] sm:$0xf]
    %v44 = vld [vmem:[#allocation3 + $0x40] sm:$0xf]
    %v45 = vunpack.c.l.bf16 %v44
    %v46 = vld [vmem:[#allocation3 + $0x48] sm:$0xf]
    %v47 = vunpack.c.l.bf16 %v46
    %v48 = vld [vmem:[#allocation3 + $0x50] sm:$0xf]
    %v49 = vunpack.c.l.bf16 %v48
    %v50 = vstv %s27
    %v51 = vmul.f32 %v50, %v45
    %v53 = vrot.slane %v45, 1
    %v55 = vadd.f32 %v51, %v53
    %v56 = vmax.f32 %v55, 0.0
    %v57 = vpack.c.bf16 %v56, %v56
    %v74 = vunpack.c.l.b16 %v28
    %v75 = vunpack.c.l.b16 %v29
    %v76 = vunpack.c.l.b16 %v30
    %v77 = vunpack.c.l.b16 %v31
    %v78 = vunpack.c.l.b16 %v32
    %v79 = vunpack.c.l.b16 %v33
    %v80 = vunpack.c.l.b16 %v34
    %v81 = vunpack.c.l.b16 %v35
    %v82 = vunpack.c.l.b16 %v36
    %v83 = vunpack.c.l.b16 %v37
    %v84 = vunpack.c.l.b16 %v38
    %v85 = vunpack.c.l.b16 %v39
    %v86 = vunpack.c.l.b16 %v40
    %v87 = vunpack.c.l.b16 %v41
    %v88 = vunpack.c.l.b16 %v42
    %v89 = vunpack.c.l.b16 %v43
    %v90 = vpack.c.b16 %v75, %v74
    %v91 = vpack.c.b16 %v77, %v76
    %v92 = vpack.c.b16 %v79, %v78
    %v93 = vpack.c.b16 %v81, %v80
    %v94 = vpack.c.b16 %v83, %v82
    %v95 = vpack.c.b16 %v85, %v84
    %v96 = vpack.c.b16 %v87, %v86
    %v97 = vpack.c.b16 %v89, %v88
    %v106 = vrot.slane %v45, 2
    %108 = vmatprep.subr.bf16.mxu0 0
    %109 = vmatpush1.bf16.msra.mxu0 %v90
    %110 = vmatprep.subr.bf16.mxu0 0
    %111 = vmatpush1.bf16.msra.mxu0 %v91
    %112 = vmatprep.subr.bf16.mxu0 0
    %113 = vmatpush1.bf16.msra.mxu0 %v92
    %114 = vmatprep.subr.bf16.mxu0 0
    %115 = vmatpush1.bf16.msra.mxu0 %v93
    %116 = vmatprep.subr.bf16.mxu0 0
    %117 = vmatpush1.bf16.msra.mxu0 %v94
    %118 = vmatprep.subr.bf16.mxu0 0
    %119 = vmatpush1.bf16.msra.mxu0 %v95
    %120 = vmatprep.subr.bf16.mxu0 0
    %121 = vmatpush1.bf16.msra.mxu0 %v96
    %122 = vmatprep.subr.bf16.mxu0 0
    %123 = vmatpush1.bf16.msra.mxu0 %v97
    %124 = vmatprep.subr.bf16.mxu0 0
    %125 = vmatpush1.bf16.msra.mxu0 0
    %126 = vmatprep.subr.bf16.mxu0 0
    %127 = vmatpush1.bf16.msra.mxu0 0
    %128 = vmatprep.subr.bf16.mxu0 0
    %129 = vmatpush1.bf16.msra.mxu0 0
    %130 = vmatprep.subr.bf16.mxu0 0
    %131 = vmatpush1.bf16.msra.mxu0 0
    %132 = vmatprep.subr.bf16.mxu0 0
    %133 = vmatpush1.bf16.msra.mxu0 0
    %134 = vmatprep.subr.bf16.mxu0 0
    %135 = vmatpush1.bf16.msra.mxu0 0
    %136 = vmatprep.subr.bf16.mxu0 0
    %137 = vmatpush1.bf16.msra.mxu0 0
    %138 = vmatprep.subr.bf16.mxu0 0
    %139 = vmatpush1.bf16.msra.mxu0 0
    %140 = vmatprep.mubr.bf16.mxu0 0
    %141 = vmatmul.mubr.bf16.gmra.mrb[0].mxu0 %v57
    %v142 = vpop.f32.mrb[0].mxu0
    %v143 = vadd.f32 %v106, %v142
    %v144 = vpop.f32.mrb[0].mxu0
    %v145 = vpop.f32.mrb[0].mxu0
    %v146 = vpop.f32.mrb[0].mxu0
    %147 = vdwg.mxu0
    %v148 = vmax.f32 %v143, 0.0
    %v149 = vlaneseq
    %v150 = vshrl.u32 %v149, 7
    %v151 = vsub.s32 0, %v150
    %v152 = vrot.slane %v148, %v151
    %v153 = vmul.f32 %v152, %v47
    %154 = vadd.xlane.f32.xlu0 %v153
    %v155 = vpop.xlane.xlu0 %154
    %v156 = vadd.f32 %v155, %v49
    %v157 = vmax.f32 %v156, 0.0
    %v158 = vmin.f32 %v157, 1.0
    %159 = vst [vmem:[%s2] sm:$0xff] %v158
    // Predicated region
    $region14: #{policy_forward.1} parent=1 // pred_check
      _
    $region15: #{policy_forward.1} parent=1 // pred_check_branch
      %161 = sbr.rel (0) target = $region17
    $region16: #{policy_forward.1} parent=1 // pred_region
      _
    $region17: #{policy_forward.1} parent=1 // pred_fallthru
      _
    // Predicated region
    $region18: #{policy_forward.1} parent=1 // pred_check
      _
    $region19: #{policy_forward.1} parent=1 // pred_check_branch
      %163 = sbr.rel (0) target = $region21
    $region20: #{policy_forward.1} parent=1 // pred_region
      _
    $region21: #{policy_forward.1} parent=1 // pred_fallthru
      _
    %164 = vsyncpa [#allocation4], 1

</llo_original>
